<compile_context>
chip_gen: v6e
topology: v6e:2x2x1
jax: 0.10.0
libtpu: 0.0.40
codegen_flags: <defaults>
</compile_context>

<pallas_src>
import jax
import jax.numpy as jnp
from jax.experimental import pallas as pl
from jax.experimental.pallas import tpu as pltpu


def _round_up(x, m):
    return ((x + m - 1) // m) * m


# ----------------------------------------------------------------------------
# Pallas kernel: y = x @ Wt + b + residual   (the wrapped module's hot path)
# ----------------------------------------------------------------------------
def _linear_residual_kernel(x_ref, wt_ref, b_ref, r_ref, o_ref):
    # x_ref: (TM, K_in) f32    wt_ref: (K_in, K_out) bf16   b_ref: (1, K_out) f32
    # r_ref: (TM, K_out) f32   o_ref:  (TM, K_out) f32
    x_bf16 = x_ref[...].astype(jnp.bfloat16)          # cheap VPU cast -> native MXU feed
    y = jnp.dot(x_bf16, wt_ref[...], preferred_element_type=jnp.float32)
    # Single fused f32 epilogue -> one lane-dense vst per tile.
    o_ref[...] = (y + b_ref[...] + r_ref[...]).astype(o_ref.dtype)


def pallas_linear_residual(x2d, weight_t_bf16, bias2d, r2d, *, block_m=512):
    """x2d: (M, K_in) f32, weight_t_bf16: (K_in, K_out) bf16 (pre-transposed at
    init), bias2d: (1, K_out) f32, r2d: (M, K_out) f32  ->  (M, K_out) f32."""
    M, k_in = x2d.shape
    k_out = weight_t_bf16.shape[1]

    # Row tile: big (mem-bound), multiple of 8 sublanes, clamped to the array.
    # No host-side padding/slicing: Pallas masks the ragged last block.
    block_m_eff = min(block_m, _round_up(M, 8))
    if M > 256 and pl.cdiv(M, block_m_eff) < 2:
        # keep >= 2 grid steps so the pipeline (and v7x's 2 TCs) can overlap
        block_m_eff = max(256, _round_up(pl.cdiv(M, 2), 8))
    grid_m = pl.cdiv(M, block_m_eff)

    # VMEM budget: x / r / out tiles double-buffered (f32), weight resident
    # single-buffered (bf16, Buffered(1)), bias resident.
    vmem_need = (2 * 4 * block_m_eff * (k_in + 2 * k_out)
                 + 2 * k_in * k_out + 4 * k_out)
    try:
        physical = int(getattr(pltpu.get_tpu_info(), "vmem_capacity_bytes",
                               64 << 20))
    except Exception:
        physical = 64 << 20                    # be safe: assume v7x-sized VMEM
    vmem_cap = int(0.75 * physical)            # headroom for compiler scratch
    vmem_limit = int(min(max(int(1.5 * vmem_need), 4 << 20), vmem_cap))

    cost = pl.CostEstimate(
        flops=2 * M * k_in * k_out,
        transcendentals=0,
        bytes_accessed=(4 * M * k_in           # x read (f32)
                        + 2 * k_in * k_out     # weight read (bf16)
                        + 4 * k_out            # bias
                        + 4 * M * k_out        # residual read
                        + 4 * M * k_out),      # output write
    )

    out = pl.pallas_call(
        _linear_residual_kernel,
        out_shape=jax.ShapeDtypeStruct((M, k_out), x2d.dtype),
        grid=(grid_m,),
        in_specs=[
            pl.BlockSpec((block_m_eff, k_in), lambda i: (i, 0)),       # x tile
            pl.BlockSpec((k_in, k_out), lambda i: (0, 0),
                         pipeline_mode=pl.Buffered(1)),                # weight (resident)
            pl.BlockSpec((1, k_out), lambda i: (0, 0),
                         pipeline_mode=pl.Buffered(1)),                # bias (resident)
            pl.BlockSpec((block_m_eff, k_out), lambda i: (i, 0)),      # residual tile
        ],
        out_specs=pl.BlockSpec((block_m_eff, k_out), lambda i: (i, 0)),
        compiler_params=pltpu.CompilerParams(
            dimension_semantics=("parallel",),   # rows shard across TCs (v7x)
            vmem_limit_bytes=vmem_limit),
        cost_estimate=cost,
    )(x2d, weight_t_bf16, bias2d, r2d)

    # TODO(synk): at large K_in add a trailing "arbitrary" K grid axis with a
    # f32 VMEM accumulator (pl.when init/finalize); at large K_out add an N
    # axis tiled in multiples of 256 on v6e/v7x (128 on v5e).
    return out


# ----------------------------------------------------------------------------
# Flattener: mirrors torch2trt's Flattener (nested pytree <-> flat tuple)
# ----------------------------------------------------------------------------
class Flattener:
    def __init__(self, treedef):
        self._treedef = treedef

    @classmethod
    def from_example(cls, example_pytree):
        _, treedef = jax.tree_util.tree_flatten(example_pytree)
        return cls(treedef)

    def flatten(self, nested):
        return tuple(jax.tree_util.tree_leaves(nested))

    def unflatten(self, *flat_args):
        return jax.tree_util.tree_unflatten(self._treedef, list(flat_args))


# ----------------------------------------------------------------------------
# Inner module wrapped by Flatten: Linear(+bias) with a residual connection.
# Takes a single nested argument (x, (residual,)) and returns (y, (residual,))
# ----------------------------------------------------------------------------
class InnerLinearResidual:
    def __init__(self, in_features, out_features, key):
        kw, kb = jax.random.split(key)
        # PyTorch-layout parameter (out, in) kept in f32 for reference math ...
        self.weight = 0.05 * jax.random.normal(
            kw, (out_features, in_features), jnp.float32)
        self.bias = 0.05 * jax.random.normal(
            kb, (out_features,), jnp.float32)
        # ... and kernel-ready layouts computed ONCE here, not per call:
        # pre-transposed + bf16 (native MXU dtype, half the DMA / VMEM bytes).
        self.weight_t_bf16 = jnp.asarray(self.weight.T).astype(jnp.bfloat16)
        self.bias2d = self.bias.reshape(1, out_features)   # (1, out) f32

    def __call__(self, inputs):
        x, (residual,) = inputs                       # nested structure
        lead = x.shape[:-1]
        x2d = x.reshape(-1, x.shape[-1])              # glue reshape
        r2d = residual.reshape(-1, residual.shape[-1])
        y2d = pallas_linear_residual(x2d, self.weight_t_bf16, self.bias2d, r2d)
        y = y2d.reshape(*lead, y2d.shape[-1])
        return (y, (residual,))


# ----------------------------------------------------------------------------
# The Flatten wrapper — exact semantics of the PyTorch module's forward()
# ----------------------------------------------------------------------------
class Flatten:
    def __init__(self, module, input_flattener=None, output_flattener=None):
        self.module = module
        self.input_flattener = input_flattener
        self.output_flattener = output_flattener

    def __call__(self, *args):
        if self.input_flattener is not None:
            args = self.input_flattener.unflatten(*args)
        output = self.module(*args)
        if self.output_flattener is not None:
            output = self.output_flattener.flatten(output)
        return output


if __name__ == "__main__":
    # M = B*S = 1024 rows -> 2 "parallel" grid steps of 512; H = 128 keeps the
    # feature axis lane-dense.  Still small (~0.5 MiB per activation tensor).
    B, S, H = 2, 512, 128

    key = jax.random.PRNGKey(0)
    kx, kr, kp = jax.random.split(key, 3)
    x = jax.random.normal(kx, (B, S, H), jnp.float32)
    residual = jax.random.normal(kr, (B, S, H), jnp.float32)

    inner = InnerLinearResidual(H, H, kp)

    # Flatteners: nested args structure is ( (x, (residual,)), )
    in_flattener = Flattener.from_example((("x", ("r",)),))
    out_flattener = Flattener.from_example(("y", ("r",)))

    model = Flatten(inner, input_flattener=in_flattener,
                    output_flattener=out_flattener)

    # Forward with FLAT args (x, residual) — exactly like the torch wrapper.
    y_flat, r_flat = model(x, residual)
    jax.block_until_ready(y_flat)
    jax.block_until_ready(r_flat)

    # Reference 1: same math as the kernel (bf16 feed, f32 accumulate).
    y_ref_bf16 = (jnp.dot(x.reshape(-1, H).astype(jnp.bfloat16),
                          inner.weight_t_bf16,
                          preferred_element_type=jnp.float32)
                  .reshape(B, S, H) + inner.bias + residual)
    # Reference 2: pure f32 math (PyTorch-layout weight), bf16-sized tolerance.
    y_ref_f32 = (jnp.einsum("bsh,oh->bso", x, inner.weight)
                 + inner.bias + residual)

    assert y_flat.shape == (B, S, H) and y_flat.dtype == jnp.float32
    assert jnp.allclose(y_flat, y_ref_bf16, atol=5e-3, rtol=5e-3)
    assert jnp.allclose(y_flat, y_ref_f32, atol=5e-2, rtol=5e-2)
    assert jnp.array_equal(r_flat, residual)

    print("KERNEL_OK")
</pallas_src>

<mosaic_0001>
module attributes {stable_mosaic.version = 11 : i64} {
  func.func @_linear_residual_kernel(%arg0: i32, %arg1: memref<512x128xf32, #tpu.memory_space<vmem>>, %arg2: memref<128x128xbf16, #tpu.memory_space<vmem>>, %arg3: memref<1x128xf32, #tpu.memory_space<vmem>>, %arg4: memref<512x128xf32, #tpu.memory_space<vmem>>, %arg5: memref<512x128xf32, #tpu.memory_space<vmem>>) attributes {dimension_semantics = [#tpu.dimension_semantics<parallel>], iteration_bounds = array<i64: 2>, scalar_prefetch = 0 : i64, scratch_operands = 0 : i64, tpu.core_type = #tpu.core_type<tc>, window_params = [{transform_indices = @transform_0, window_bounds = array<i64: 512, 128>}, {pipeline_mode = #tpu.pipeline_mode<synchronous>, transform_indices = @transform_1, window_bounds = array<i64: 128, 128>}, {pipeline_mode = #tpu.pipeline_mode<synchronous>, transform_indices = @transform_2, window_bounds = array<i64: 1, 128>}, {transform_indices = @transform_3, window_bounds = array<i64: 512, 128>}, {transform_indices = @transform_4, window_bounds = array<i64: 512, 128>}]} {
    %c0 = arith.constant 0 : index
    %c0_0 = arith.constant 0 : index
    %0 = vector.load %arg1[%c0, %c0_0] : memref<512x128xf32, #tpu.memory_space<vmem>>, vector<512x128xf32>
    %1 = arith.truncf %0 : vector<512x128xf32> to vector<512x128xbf16>
    %c0_1 = arith.constant 0 : index
    %c0_2 = arith.constant 0 : index
    %2 = vector.load %arg2[%c0_1, %c0_2] : memref<128x128xbf16, #tpu.memory_space<vmem>>, vector<128x128xbf16>
    %cst = arith.constant dense<0.000000e+00> : vector<512x128xf32>
    %3 = tpu.matmul %1, %2, %cst {dimension_numbers = #tpu.dot_dimension_numbers<[1], [0], [0], [1], [0, 0, 1, 1], [], []>} : vector<512x128xbf16>, vector<128x128xbf16>, vector<512x128xf32> -> vector<512x128xf32>
    %c0_3 = arith.constant 0 : index
    %c0_4 = arith.constant 0 : index
    %4 = vector.load %arg3[%c0_3, %c0_4] : memref<1x128xf32, #tpu.memory_space<vmem>>, vector<1x128xf32>
    %5 = vector.broadcast %4 : vector<1x128xf32> to vector<512x128xf32>
    %6 = arith.addf %3, %5 : vector<512x128xf32>
    %c0_5 = arith.constant 0 : index
    %c0_6 = arith.constant 0 : index
    %7 = vector.load %arg4[%c0_5, %c0_6] : memref<512x128xf32, #tpu.memory_space<vmem>>, vector<512x128xf32>
    %8 = arith.addf %6, %7 : vector<512x128xf32>
    %c0_7 = arith.constant 0 : index
    %c0_8 = arith.constant 0 : index
    %9 = vector.load %arg5[%c0_7, %c0_8] : memref<512x128xf32, #tpu.memory_space<vmem>>, vector<512x128xf32>
    tpu.vector_store %arg5[%c0_7, %c0_8], %8 {strides = array<i32>} : memref<512x128xf32, #tpu.memory_space<vmem>>, vector<512x128xf32>,
    return
  }
  func.func @transform_0(%arg0: i32) -> (i32, i32) {
    %c0_i32 = arith.constant 0 : i32
    %c0_i32_0 = arith.constant 0 : i32
    return %arg0, %c0_i32 : i32, i32
  }
  func.func @transform_1(%arg0: i32) -> (i32, i32) {
    %c0_i32 = arith.constant 0 : i32
    %c0_i32_0 = arith.constant 0 : i32
    %c0_i32_1 = arith.constant 0 : i32
    return %c0_i32, %c0_i32_0 : i32, i32
  }
  func.func @transform_2(%arg0: i32) -> (i32, i32) {
    %c0_i32 = arith.constant 0 : i32
    %c0_i32_0 = arith.constant 0 : i32
    %c0_i32_1 = arith.constant 0 : i32
    return %c0_i32, %c0_i32_0 : i32, i32
  }
  func.func @transform_3(%arg0: i32) -> (i32, i32) {
    %c0_i32 = arith.constant 0 : i32
    %c0_i32_0 = arith.constant 0 : i32
    return %arg0, %c0_i32 : i32, i32
  }
  func.func @transform_4(%arg0: i32) -> (i32, i32) {
    %c0_i32 = arith.constant 0 : i32
    %c0_i32_0 = arith.constant 0 : i32
    return %arg0, %c0_i32 : i32, i32
  }
}

</mosaic_0001>

<llo_original>
// kernel: tpu_custom_call.1
$region0: #{tpu_custom_call.1}
  #allocation0 [shape = 'u32[]', space=smem, size = 0x4, offset = 0x4, fixed_abs, tag = 'smem constant byte address 0x4 - core index']
  #allocation1 [shape = 'u32[144,128]{1,0:T(1,128)}', space=vmem, size = 0x12000, scoped, tag = 'internal scratch']
  %s0 = inlined_call_operand.hbm [shape: f32[1024,128], index: 0, kind: input, shape index: {}]
  %s1 = inlined_call_operand.hbm [shape: bf16[128,128], index: 1, kind: input, shape index: {}]
  %s2 = inlined_call_operand.vmem [shape: f32[1,128], index: 2, kind: input, shape index: {}]
  %s3 = inlined_call_operand.hbm [shape: f32[1024,128], index: 3, kind: input, shape index: {}]
  %s4 = inlined_call_operand.hbm [shape: f32[1024,128], index: 4, kind: output, shape index: {}]
  %s5 = sld [smem:[#allocation0]]
  $region61: #{tpu_custom_call.1} parent=0
    _
  %s7 = ssub.s32 1, %s5
  %s8 = scalar_select 0, %s7, %s5
  $region1: #{tpu_custom_call.1} parent=0
    #allocation2 [shape = 'u8[524288]{0}', space=vmem, size = 0x80000, scoped, tag = 'input window, operand 0']
    #allocation3 [shape = 's32[2]{0}', space=sflag, size = 0x8, scoped, tag = 'scoped memory for tpu_custom_call.1']
    #allocation4 [shape = 's32[2]{0}', space=sflag, size = 0x8, scoped, tag = 'scoped memory for tpu_custom_call.1']
    #allocation5 [shape = 'u8[32768]{0}', space=vmem, size = 0x8000, scoped, tag = 'input window, operand 1, single buffered']
    #allocation6 [shape = 's32[1]{0}', space=sflag, size = 0x4, scoped, tag = 'scoped memory for tpu_custom_call.1']
    #allocation7 [shape = 'u8[524288]{0}', space=vmem, size = 0x80000, scoped, tag = 'input window, operand 3']
    #allocation8 [shape = 'u8[524288]{0}', space=vmem, size = 0x80000, scoped, tag = 'output window, operand 0']
    %9 = vsyncpa [#allocation3], 0
    %s10 = scalar_lea.sflag [#allocation3], 1
    %11 = vsyncpa %s10, 0
    %12 = vsyncpa [#allocation6], 0
    %13 = vsyncpa [#allocation4], 0
    %s14 = scalar_lea.sflag [#allocation4], 1
    %15 = vsyncpa %s14, 0
    loop: start=0, step=1, limit=4
    $region2: #{tpu_custom_call.1} parent=1 // loop_pre_header
      _
    $region3: #{tpu_custom_call.1} parent=1 // loop_header
      %s17 = sphi 0, %s21
      %p18 = scmp.ge.s32.totalorder %s17, 4
      %s27 = sphi 0, %s29
      %s30 = sphi 0, %s27
      %s31 = sphi 0, %s30
      %s47 = sphi 0, %s31
      %s51 = sphi 0, %s51
      %s53 = sphi 0, %s51
      %s54 = sphi 0, %s53
      %s68 = sphi 0, %s54
      %s72 = sphi 0, %s72
      %s74 = sphi 0, %s72
      %s75 = sphi 0, %s74
      %s89 = sphi 0, %s75
      %s95 = sphi 0, %s97
      %s98 = sphi 0, %s95
      %s99 = sphi 0, %s98
      %s115 = sphi 0, %s99
      %s121 = sphi 0, %s123
      %s124 = sphi 0, %s121
      %s125 = sphi 0, %s124
      %s141 = sphi 0, %s125
    $region4: #{tpu_custom_call.1} parent=1 // loop_header_branch
      %20 = sbr.rel (%p18) target = $region8
    $region5: #{tpu_custom_call.1} parent=1 // loop_body
      %s22 = ssub.s32 %s17, 1
      %s23 = ssub.s32 %s17, 2
      %s24 = sadd.s32 %s17, 1
      %s25 = ssub.s32 %s17, %s24
      %p26 = scmp.eq.s32.totalorder %s25, 0
      %s28 = sadd.s32 %s27, 1
      %s29 = scalar_select %p26, %s27, %s28
      %p32 = pneg %p26
      %p33 = scmp.eq.s32.totalorder %s17, 1
      %p34 = por %p32, %p33
      %p35 = scmp.ne.s32.totalorder %s27, %s30
      %p36 = scmp.eq.s32.totalorder %s17, 0
      %p37 = por %p35, %p36
      %p38 = scmp.ne.s32.totalorder %s27, %s30
      %p39 = scmp.eq.s32.totalorder %s22, 1
      %p40 = por %p38, %p39
      %p41 = scmp.ne.s32.totalorder %s30, %s31
      %p42 = scmp.eq.s32.totalorder %s22, 0
      %p43 = por %p41, %p42
      %p44 = scmp.ne.s32.totalorder %s30, %s31
      %p45 = scmp.eq.s32.totalorder %s23, 1
      %p46 = por %p44, %p45
      %p48 = scmp.ne.s32.totalorder %s31, %s47
      %p49 = scmp.eq.s32.totalorder %s23, 0
      %p50 = por %p48, %p49
      %s52 = sadd.s32 %s51, 1
      %p55 = scmp.eq.s32.totalorder %s17, 1
      %p56 = scmp.ne.s32.totalorder %s51, %s53
      %p57 = scmp.eq.s32.totalorder %s17, 0
      %p58 = por %p56, %p57
      %p59 = scmp.ne.s32.totalorder %s51, %s53
      %p60 = scmp.eq.s32.totalorder %s22, 1
      %p61 = por %p59, %p60
      %p62 = scmp.ne.s32.totalorder %s53, %s54
      %p63 = scmp.eq.s32.totalorder %s22, 0
      %p64 = por %p62, %p63
      %p65 = scmp.ne.s32.totalorder %s53, %s54
      %p66 = scmp.eq.s32.totalorder %s23, 1
      %p67 = por %p65, %p66
      %p69 = scmp.ne.s32.totalorder %s54, %s68
      %p70 = scmp.eq.s32.totalorder %s23, 0
      %p71 = por %p69, %p70
      %s73 = sadd.s32 %s72, 1
      %p76 = scmp.eq.s32.totalorder %s17, 1
      %p77 = scmp.ne.s32.totalorder %s72, %s74
      %p78 = scmp.eq.s32.totalorder %s17, 0
      %p79 = por %p77, %p78
      %p80 = scmp.ne.s32.totalorder %s72, %s74
      %p81 = scmp.eq.s32.totalorder %s22, 1
      %p82 = por %p80, %p81
      %p83 = scmp.ne.s32.totalorder %s74, %s75
      %p84 = scmp.eq.s32.totalorder %s22, 0
      %p85 = por %p83, %p84
      %p86 = scmp.ne.s32.totalorder %s74, %s75
      %p87 = scmp.eq.s32.totalorder %s23, 1
      %p88 = por %p86, %p87
      %p90 = scmp.ne.s32.totalorder %s75, %s89
      %p91 = scmp.eq.s32.totalorder %s23, 0
      %p92 = por %p90, %p91
      %s93 = ssub.s32 %s17, %s24
      %p94 = scmp.eq.s32.totalorder %s93, 0
      %s96 = sadd.s32 %s95, 1
      %s97 = scalar_select %p94, %s95, %s96
      %p100 = pneg %p94
      %p101 = scmp.eq.s32.totalorder %s17, 1
      %p102 = por %p100, %p101
      %p103 = scmp.ne.s32.totalorder %s95, %s98
      %p104 = scmp.eq.s32.totalorder %s17, 0
      %p105 = por %p103, %p104
      %p106 = scmp.ne.s32.totalorder %s95, %s98
      %p107 = scmp.eq.s32.totalorder %s22, 1
      %p108 = por %p106, %p107
      %p109 = scmp.ne.s32.totalorder %s98, %s99
      %p110 = scmp.eq.s32.totalorder %s22, 0
      %p111 = por %p109, %p110
      %p112 = scmp.ne.s32.totalorder %s98, %s99
      %p113 = scmp.eq.s32.totalorder %s23, 1
      %p114 = por %p112, %p113
      %p116 = scmp.ne.s32.totalorder %s99, %s115
      %p117 = scmp.eq.s32.totalorder %s23, 0
      %p118 = por %p116, %p117
      %s119 = ssub.s32 %s17, %s24
      %p120 = scmp.eq.s32.totalorder %s119, 0
      %s122 = sadd.s32 %s121, 1
      %s123 = scalar_select %p120, %s121, %s122
      %p126 = pneg %p120
      %p127 = scmp.eq.s32.totalorder %s17, 1
      %p128 = por %p126, %p127
      %p129 = scmp.ne.s32.totalorder %s121, %s124
      %p130 = scmp.eq.s32.totalorder %s17, 0
      %p131 = por %p129, %p130
      %p132 = scmp.ne.s32.totalorder %s121, %s124
      %p133 = scmp.eq.s32.totalorder %s22, 1
      %p134 = por %p132, %p133
      %p135 = scmp.ne.s32.totalorder %s124, %s125
      %p136 = scmp.eq.s32.totalorder %s22, 0
      %p137 = por %p135, %p136
      %p138 = scmp.ne.s32.totalorder %s124, %s125
      %p139 = scmp.eq.s32.totalorder %s23, 1
      %p140 = por %p138, %p139
      %p142 = scmp.ne.s32.totalorder %s125, %s141
      %p143 = scmp.eq.s32.totalorder %s23, 0
      %p144 = por %p142, %p143
      %p145 = scmp.le.s32.totalorder 1, %s17
      %p146 = scmp.lt.s32.totalorder %s17, 3
      %p147 = pnand %p145, %p146
      %p148 = pneg %p147
      // Predicated region
      $region9: #{tpu_custom_call.1} parent=5 // pred_check
        _
      $region10: #{tpu_custom_call.1} parent=5 // pred_check_branch
        %150 = sbr.rel (%p147) target = $region12
      $region11: #{tpu_custom_call.1} parent=5 // pred_region
        %s151 = ssub.s32 %s17, 1
        // Predicated region
        $region13: #{tpu_custom_call.1} parent=11 // pred_check
          %p152 = pneg %p64
        $region14: #{tpu_custom_call.1} parent=11 // pred_check_branch
          %154 = sbr.rel (%p152) target = $region16
        $region15: #{tpu_custom_call.1} parent=11 // pred_region
          %s156 = ssub.s32 1024, 1024
          %157 = vsyncadd [#allocation6], %s156
          %s158 = sshll.u32 [#allocation5], 4
          %s159 = int_to_ptr.vmem [resolvable:$true] %s158
          %164 = dma.hbm_to_vmem [thread:$0]  %s1, 1024, %s159, [#allocation6], 64, 64, 4
        $region16: #{tpu_custom_call.1} parent=11 // pred_fallthru
          _
        // Predicated region
        $region17: #{tpu_custom_call.1} parent=11 // pred_check
          %p165 = pneg %p85
        $region18: #{tpu_custom_call.1} parent=11 // pred_check_branch
          %167 = sbr.rel (%p165) target = $region20
        $region19: #{tpu_custom_call.1} parent=11 // pred_region
          _
        $region20: #{tpu_custom_call.1} parent=11 // pred_fallthru
          _
      $region12: #{tpu_custom_call.1} parent=5 // pred_fallthru
        _
      %p168 = scmp.lt.s32.totalorder %s17, 2
      // Predicated region
      $region21: #{tpu_custom_call.1} parent=5 // pred_check
        %p169 = pneg %p168
      $region22: #{tpu_custom_call.1} parent=5 // pred_check_branch
        %171 = sbr.rel (%p169) target = $region24
      $region23: #{tpu_custom_call.1} parent=5 // pred_region
        // Predicated region
        $region25: #{tpu_custom_call.1} parent=23 // pred_check
          %p172 = pneg %p37
        $region26: #{tpu_custom_call.1} parent=23 // pred_check_branch
          %174 = sbr.rel (%p172) target = $region28
        $region27: #{tpu_custom_call.1} parent=23 // pred_region
          %s175 = sand.u32 %s17, 1
          %s176 = scalar_lea.sflag [#allocation3], %s175
          %s177 = sand.u32 %s27, 1
          %s178 = smul.addr %s177, 512
          %s179 = scalar_lea.vmem [#allocation2], %s178
          %s180 = smul.u32 64, %s17
          %s182 = ssub.s32 8192, 8192
          %183 = vsyncadd %s176, %s182
          %s184 = smul.addr %s180, 128
          %s185 = scalar_lea.hbm %s0, %s184
          %s186 = sshll.u32 %s179, 4
          %s187 = int_to_ptr.vmem [resolvable:$true] %s186
          %192 = dma.hbm_to_vmem [thread:$0]  %s185, 8192, %s187, %s176, 128, 128, 8
        $region28: #{tpu_custom_call.1} parent=23 // pred_fallthru
          _
        // Predicated region
        $region29: #{tpu_custom_call.1} parent=23 // pred_check
          %p193 = pneg %p105
        $region30: #{tpu_custom_call.1} parent=23 // pred_check_branch
          %195 = sbr.rel (%p193) target = $region32
        $region31: #{tpu_custom_call.1} parent=23 // pred_region
          %s196 = sand.u32 %s17, 1
          %s197 = scalar_lea.sflag [#allocation3], %s196
          %s198 = sand.u32 %s95, 1
          %s199 = smul.addr %s198, 512
          %s200 = scalar_lea.vmem [#allocation7], %s199
          %s201 = smul.u32 64, %s17
          %s203 = ssub.s32 8192, 8192
          %204 = vsyncadd %s197, %s203
          %s205 = smul.addr %s201, 128
          %s206 = scalar_lea.hbm %s3, %s205
          %s207 = sshll.u32 %s200, 4
          %s208 = int_to_ptr.vmem [resolvable:$true] %s207
          %213 = dma.hbm_to_vmem [thread:$0]  %s206, 8192, %s208, %s197, 128, 128, 8
        $region32: #{tpu_custom_call.1} parent=23 // pred_fallthru
          _
      $region24: #{tpu_custom_call.1} parent=5 // pred_fallthru
        _
      %p214 = scmp.le.s32.totalorder 1, %s17
      %p215 = scmp.lt.s32.totalorder %s17, 3
      %p216 = pnand %p214, %p215
      %p217 = pneg %p216
      // Predicated region
      $region33: #{tpu_custom_call.1} parent=5 // pred_check
        _
      $region34: #{tpu_custom_call.1} parent=5 // pred_check_branch
        %219 = sbr.rel (%p216) target = $region36
      $region35: #{tpu_custom_call.1} parent=5 // pred_region
        %s220 = ssub.s32 %s17, 1
        %s221 = sand.u32 %s22, 1
        %s222 = scalar_lea.sflag [#allocation3], %s221
        %s223 = sand.u32 %s30, 1
        %s224 = smul.addr %s223, 512
        %s225 = scalar_lea.vmem [#allocation2], %s224
        // Predicated region
        $region37: #{tpu_custom_call.1} parent=35 // pred_check
          %p226 = pneg %p43
        $region38: #{tpu_custom_call.1} parent=35 // pred_check_branch
          %228 = sbr.rel (%p226) target = $region40
        $region39: #{tpu_custom_call.1} parent=35 // pred_region
          %229 = dma.done %s222, 8192
        $region40: #{tpu_custom_call.1} parent=35 // pred_fallthru
          _
        // Predicated region
        $region41: #{tpu_custom_call.1} parent=35 // pred_check
          %p230 = pneg %p64
        $region42: #{tpu_custom_call.1} parent=35 // pred_check_branch
          %232 = sbr.rel (%p230) target = $region44
        $region43: #{tpu_custom_call.1} parent=35 // pred_region
          %233 = dma.done [#allocation6], 1024
        $region44: #{tpu_custom_call.1} parent=35 // pred_fallthru
          _
        %s234 = sand.u32 %s22, 1
        %s235 = scalar_lea.sflag [#allocation3], %s234
        %s236 = sand.u32 %s98, 1
        %s237 = smul.addr %s236, 512
        %s238 = scalar_lea.vmem [#allocation7], %s237
        // Predicated region
        $region45: #{tpu_custom_call.1} parent=35 // pred_check
          %p239 = pneg %p111
        $region46: #{tpu_custom_call.1} parent=35 // pred_check_branch
          %241 = sbr.rel (%p239) target = $region48
        $region47: #{tpu_custom_call.1} parent=35 // pred_region
          %242 = dma.done %s235, 8192
        $region48: #{tpu_custom_call.1} parent=35 // pred_fallthru
          _
        %s243 = sand.u32 %s22, 1
        %s244 = scalar_lea.sflag [#allocation3], %s243
        %s245 = sand.u32 %s30, 1
        %s246 = smul.addr %s245, 512
        %s247 = scalar_lea.vmem [#allocation2], %s246
        %p248 = pneg %p43
        %p249 = pneg %p40
        %p250 = pneg %p64
        %p251 = pneg %p61
        %p252 = pneg %p85
        %p253 = pneg %p82
        %s254 = sand.u32 %s22, 1
        %s255 = scalar_lea.sflag [#allocation3], %s254
        %s256 = sand.u32 %s98, 1
        %s257 = smul.addr %s256, 512
        %s258 = scalar_lea.vmem [#allocation7], %s257
        %p259 = pneg %p111
        %p260 = pneg %p108
        %p261 = pneg %p137
        %p262 = pneg %p134
        %s263 = sand.u32 %s124, 1
        %s264 = scalar_lea.sflag [#allocation4], %s263
        %s265 = sand.u32 %s124, 1
        %s266 = smul.addr %s265, 512
        %s267 = scalar_lea.vmem [#allocation8], %s266
        %s268 = smul.u32 64, %s22
        %s269 = smul.u32 64, %s22
        %s270 = smul.u32 64, %s22
        %v272 = vld [vmem:[%s225] sm:$0xff]
        %v273 = vld [vmem:[%s225 + $0x8] sm:$0xff]
        %v274 = vld [vmem:[%s225 + $0x10] sm:$0xff]
        %v275 = vld [vmem:[%s225 + $0x18] sm:$0xff]
        %v276 = vld [vmem:[%s225 + $0x20] sm:$0xff]
        %v277 = vld [vmem:[%s225 + $0x28] sm:$0xff]
        %v278 = vld [vmem:[%s225 + $0x30] sm:$0xff]
        %v279 = vld [vmem:[%s225 + $0x38] sm:$0xff]
        %v280 = vld [vmem:[%s225 + $0x40] sm:$0xff]
        %v281 = vld [vmem:[%s225 + $0x48] sm:$0xff]
        %v282 = vld [vmem:[%s225 + $0x50] sm:$0xff]
        %v283 = vld [vmem:[%s225 + $0x58] sm:$0xff]
        %v284 = vld [vmem:[%s225 + $0x60] sm:$0xff]
        %v285 = vld [vmem:[%s225 + $0x68] sm:$0xff]
        %v286 = vld [vmem:[%s225 + $0x70] sm:$0xff]
        %v287 = vld [vmem:[%s225 + $0x78] sm:$0xff]
        %v288 = vld [vmem:[%s225 + $0x80] sm:$0xff]
        %v289 = vld [vmem:[%s225 + $0x88] sm:$0xff]
        %v290 = vld [vmem:[%s225 + $0x90] sm:$0xff]
        %v291 = vld [vmem:[%s225 + $0x98] sm:$0xff]
        %v292 = vld [vmem:[%s225 + $0xa0] sm:$0xff]
        %v293 = vld [vmem:[%s225 + $0xa8] sm:$0xff]
        %v294 = vld [vmem:[%s225 + $0xb0] sm:$0xff]
        %v295 = vld [vmem:[%s225 + $0xb8] sm:$0xff]
        %v296 = vld [vmem:[%s225 + $0xc0] sm:$0xff]
        %v297 = vld [vmem:[%s225 + $0xc8] sm:$0xff]
        %v298 = vld [vmem:[%s225 + $0xd0] sm:$0xff]
        %v299 = vld [vmem:[%s225 + $0xd8] sm:$0xff]
        %v300 = vld [vmem:[%s225 + $0xe0] sm:$0xff]
        %v301 = vld [vmem:[%s225 + $0xe8] sm:$0xff]
        %v302 = vld [vmem:[%s225 + $0xf0] sm:$0xff]
        %v303 = vld [vmem:[%s225 + $0xf8] sm:$0xff]
        %v304 = vld [vmem:[%s225 + $0x100] sm:$0xff]
        %v305 = vld [vmem:[%s225 + $0x108] sm:$0xff]
        %v306 = vld [vmem:[%s225 + $0x110] sm:$0xff]
        %v307 = vld [vmem:[%s225 + $0x118] sm:$0xff]
        %v308 = vld [vmem:[%s225 + $0x120] sm:$0xff]
        %v309 = vld [vmem:[%s225 + $0x128] sm:$0xff]
        %v310 = vld [vmem:[%s225 + $0x130] sm:$0xff]
        %v311 = vld [vmem:[%s225 + $0x138] sm:$0xff]
        %v312 = vld [vmem:[%s225 + $0x140] sm:$0xff]
        %v313 = vld [vmem:[%s225 + $0x148] sm:$0xff]
        %v314 = vld [vmem:[%s225 + $0x150] sm:$0xff]
        %v315 = vld [vmem:[%s225 + $0x158] sm:$0xff]
        %v316 = vld [vmem:[%s225 + $0x160] sm:$0xff]
        %v317 = vld [vmem:[%s225 + $0x168] sm:$0xff]
        %v318 = vld [vmem:[%s225 + $0x170] sm:$0xff]
        %v319 = vld [vmem:[%s225 + $0x178] sm:$0xff]
        %v320 = vld [vmem:[%s225 + $0x180] sm:$0xff]
        %v321 = vld [vmem:[%s225 + $0x188] sm:$0xff]
        %v322 = vld [vmem:[%s225 + $0x190] sm:$0xff]
        %v323 = vld [vmem:[%s225 + $0x198] sm:$0xff]
        %v324 = vld [vmem:[%s225 + $0x1a0] sm:$0xff]
        %v325 = vld [vmem:[%s225 + $0x1a8] sm:$0xff]
        %v326 = vld [vmem:[%s225 + $0x1b0] sm:$0xff]
        %v327 = vld [vmem:[%s225 + $0x1b8] sm:$0xff]
        %v328 = vld [vmem:[%s225 + $0x1c0] sm:$0xff]
        %v329 = vld [vmem:[%s225 + $0x1c8] sm:$0xff]
        %v330 = vld [vmem:[%s225 + $0x1d0] sm:$0xff]
        %v331 = vld [vmem:[%s225 + $0x1d8] sm:$0xff]
        %v332 = vld [vmem:[%s225 + $0x1e0] sm:$0xff]
        %v333 = vld [vmem:[%s225 + $0x1e8] sm:$0xff]
        %v334 = vld [vmem:[%s225 + $0x1f0] sm:$0xff]
        %v335 = vld [vmem:[%s225 + $0x1f8] sm:$0xff]
        %v336 = vpack.c.bf16 %v273, %v272
        %v337 = vpack.c.bf16 %v275, %v274
        %v338 = vpack.c.bf16 %v277, %v276
        %v339 = vpack.c.bf16 %v279, %v278
        %v340 = vpack.c.bf16 %v281, %v280
        %v341 = vpack.c.bf16 %v283, %v282
        %v342 = vpack.c.bf16 %v285, %v284
        %v343 = vpack.c.bf16 %v287, %v286
        %v344 = vpack.c.bf16 %v289, %v288
        %v345 = vpack.c.bf16 %v291, %v290
        %v346 = vpack.c.bf16 %v293, %v292
        %v347 = vpack.c.bf16 %v295, %v294
        %v348 = vpack.c.bf16 %v297, %v296
        %v349 = vpack.c.bf16 %v299, %v298
        %v350 = vpack.c.bf16 %v301, %v300
        %v351 = vpack.c.bf16 %v303, %v302
        %v352 = vpack.c.bf16 %v305, %v304
        %v353 = vpack.c.bf16 %v307, %v306
        %v354 = vpack.c.bf16 %v309, %v308
        %v355 = vpack.c.bf16 %v311, %v310
        %v356 = vpack.c.bf16 %v313, %v312
        %v357 = vpack.c.bf16 %v315, %v314
        %v358 = vpack.c.bf16 %v317, %v316
        %v359 = vpack.c.bf16 %v319, %v318
        %v360 = vpack.c.bf16 %v321, %v320
        %v361 = vpack.c.bf16 %v323, %v322
        %v362 = vpack.c.bf16 %v325, %v324
        %v363 = vpack.c.bf16 %v327, %v326
        %v364 = vpack.c.bf16 %v329, %v328
        %v365 = vpack.c.bf16 %v331, %v330
        %v366 = vpack.c.bf16 %v333, %v332
        %v367 = vpack.c.bf16 %v335, %v334
        %v368 = vld [vmem:[#allocation5] sm:$0xf]
        %v369 = vld [vmem:[#allocation5 + $0x4] sm:$0xf]
        %v370 = vld [vmem:[#allocation5 + $0x8] sm:$0xf]
        %v371 = vld [vmem:[#allocation5 + $0xc] sm:$0xf]
        %v372 = vld [vmem:[#allocation5 + $0x10] sm:$0xf]
        %v373 = vld [vmem:[#allocation5 + $0x14] sm:$0xf]
        %v374 = vld [vmem:[#allocation5 + $0x18] sm:$0xf]
        %v375 = vld [vmem:[#allocation5 + $0x1c] sm:$0xf]
        %v376 = vld [vmem:[#allocation5 + $0x20] sm:$0xf]
        %v377 = vld [vmem:[#allocation5 + $0x24] sm:$0xf]
        %v378 = vld [vmem:[#allocation5 + $0x28] sm:$0xf]
        %v379 = vld [vmem:[#allocation5 + $0x2c] sm:$0xf]
        %v380 = vld [vmem:[#allocation5 + $0x30] sm:$0xf]
        %v381 = vld [vmem:[#allocation5 + $0x34] sm:$0xf]
        %v382 = vld [vmem:[#allocation5 + $0x38] sm:$0xf]
        %v383 = vld [vmem:[#allocation5 + $0x3c] sm:$0xf]
        %v384 = vld [vmem:[%s2] sm:$0x1]
        %v386 = vlaneseq
        %v387 = vshrl.u32 %v386, 7
        %v388 = vsub.s32 0, %v387
        %v389 = vrot.slane %v384, %v388
        %v407 = vunpack.c.l.b16 %v368
        %v408 = vunpack.c.l.b16 %v369
        %v409 = vunpack.c.l.b16 %v370
        %v410 = vunpack.c.l.b16 %v371
        %v411 = vunpack.c.l.b16 %v372
        %v412 = vunpack.c.l.b16 %v373
        %v413 = vunpack.c.l.b16 %v374
        %v414 = vunpack.c.l.b16 %v375
        %v415 = vunpack.c.l.b16 %v376
        %v416 = vunpack.c.l.b16 %v377
        %v417 = vunpack.c.l.b16 %v378
        %v418 = vunpack.c.l.b16 %v379
        %v419 = vunpack.c.l.b16 %v380
        %v420 = vunpack.c.l.b16 %v381
        %v421 = vunpack.c.l.b16 %v382
        %v422 = vunpack.c.l.b16 %v383
        %v423 = vpack.c.b16 %v408, %v407
        %v424 = vpack.c.b16 %v410, %v409
        %v425 = vpack.c.b16 %v412, %v411
        %v426 = vpack.c.b16 %v414, %v413
        %v427 = vpack.c.b16 %v416, %v415
        %v428 = vpack.c.b16 %v418, %v417
        %v429 = vpack.c.b16 %v420, %v419
        %v430 = vpack.c.b16 %v422, %v421
        %439 = vmatprep.subr.bf16.mxu0 0
        %440 = vmatpush1.bf16.msra.mxu0 %v430
        %441 = vmatprep.subr.bf16.mxu0 0
        %442 = vmatpush1.bf16.msra.mxu0 %v429
        %443 = vmatprep.subr.bf16.mxu0 0
        %444 = vmatpush1.bf16.msra.mxu0 %v428
        %445 = vmatprep.subr.bf16.mxu0 0
        %446 = vmatpush1.bf16.msra.mxu0 %v427
        %447 = vmatprep.subr.bf16.mxu0 0
        %448 = vmatpush1.bf16.msra.mxu0 %v426
        %449 = vmatprep.subr.bf16.mxu0 0
        %450 = vmatpush1.bf16.msra.mxu0 %v425
        %451 = vmatprep.subr.bf16.mxu0 0
        %452 = vmatpush1.bf16.msra.mxu0 %v424
        %453 = vmatprep.subr.bf16.mxu0 0
        %454 = vmatpush1.bf16.msra.mxu0 %v423
        %455 = vmatprep.subr.bf16.mxu0 0
        %456 = vmatpush2.bf16.msra.mxu0 0
        %457 = vmatprep.subr.bf16.mxu0 0
        %458 = vmatpush2.bf16.msra.mxu0 0
        %459 = vmatprep.subr.bf16.mxu0 0
        %460 = vmatpush2.bf16.msra.mxu0 0
        %461 = vmatprep.subr.bf16.mxu0 0
        %462 = vmatpush2.bf16.msra.mxu0 0
        %463 = vmatprep.subr.bf16.mxu0 0
        %464 = vmatpush2.bf16.msra.mxu0 0
        %465 = vmatprep.subr.bf16.mxu0 0
        %466 = vmatpush2.bf16.msra.mxu0 0
        %467 = vmatprep.subr.bf16.mxu0 0
        %468 = vmatpush2.bf16.msra.mxu0 0
        %469 = vmatprep.subr.bf16.mxu0 0
        %470 = vmatpush2.bf16.msra.mxu0 0
        %471 = vmatprep.mubr.bf16.mxu0 0
        %472 = vmatmul.mubr.bf16.gmra.mxu0 %v336
        %v473 = vpop.f32.mrf.mxu0
        %v474 = vadd.f32 %v389, %v473
        %v475 = vpop.f32.mrf.mxu0
        %v476 = vpop.f32.mrf.mxu0
        %v477 = vadd.f32 %v389, %v476
        %v478 = vpop.f32.mrf.mxu0
        %479 = vmatprep.mubr.bf16.mxu0 0
        %480 = vmatmul.mubr.bf16.gmra.mxu0 %v337
        %v481 = vpop.f32.mrf.mxu0
        %v482 = vadd.f32 %v389, %v481
        %v483 = vpop.f32.mrf.mxu0
        %v484 = vpop.f32.mrf.mxu0
        %v485 = vadd.f32 %v389, %v484
        %v486 = vpop.f32.mrf.mxu0
        %487 = vmatprep.mubr.bf16.mxu0 0
        %488 = vmatmul.mubr.bf16.gmra.mxu0 %v338
        %v489 = vpop.f32.mrf.mxu0
        %v490 = vadd.f32 %v389, %v489
        %v491 = vpop.f32.mrf.mxu0
        %v492 = vpop.f32.mrf.mxu0
        %v493 = vadd.f32 %v389, %v492
        %v494 = vpop.f32.mrf.mxu0
        %495 = vmatprep.mubr.bf16.mxu0 0
        %496 = vmatmul.mubr.bf16.gmra.mxu0 %v339
        %v497 = vpop.f32.mrf.mxu0
        %v498 = vadd.f32 %v389, %v497
        %v499 = vpop.f32.mrf.mxu0
        %v500 = vpop.f32.mrf.mxu0
        %v501 = vadd.f32 %v389, %v500
        %v502 = vpop.f32.mrf.mxu0
        %503 = vmatprep.mubr.bf16.mxu0 0
        %504 = vmatmul.mubr.bf16.gmra.mxu0 %v340
        %v505 = vpop.f32.mrf.mxu0
        %v506 = vadd.f32 %v389, %v505
        %v507 = vpop.f32.mrf.mxu0
        %v508 = vpop.f32.mrf.mxu0
        %v509 = vadd.f32 %v389, %v508
        %v510 = vpop.f32.mrf.mxu0
        %511 = vmatprep.mubr.bf16.mxu0 0
        %512 = vmatmul.mubr.bf16.gmra.mxu0 %v341
        %v513 = vpop.f32.mrf.mxu0
        %v514 = vadd.f32 %v389, %v513
        %v515 = vpop.f32.mrf.mxu0
        %v516 = vpop.f32.mrf.mxu0
        %v517 = vadd.f32 %v389, %v516
        %v518 = vpop.f32.mrf.mxu0
        %519 = vmatprep.mubr.bf16.mxu0 0
        %520 = vmatmul.mubr.bf16.gmra.mxu0 %v342
        %v521 = vpop.f32.mrf.mxu0
        %v522 = vadd.f32 %v389, %v521
        %v523 = vpop.f32.mrf.mxu0
        %v524 = vpop.f32.mrf.mxu0
        %v525 = vadd.f32 %v389, %v524
        %v526 = vpop.f32.mrf.mxu0
        %527 = vmatprep.mubr.bf16.mxu0 0
        %528 = vmatmul.mubr.bf16.gmra.mxu0 %v343
        %v529 = vpop.f32.mrf.mxu0
        %v530 = vadd.f32 %v389, %v529
        %v531 = vpop.f32.mrf.mxu0
        %v532 = vpop.f32.mrf.mxu0
        %v533 = vadd.f32 %v389, %v532
        %v534 = vpop.f32.mrf.mxu0
        %535 = vmatprep.mubr.bf16.mxu0 0
        %536 = vmatmul.mubr.bf16.gmra.mxu0 %v344
        %v537 = vpop.f32.mrf.mxu0
        %v538 = vadd.f32 %v389, %v537
        %v539 = vpop.f32.mrf.mxu0
        %v540 = vpop.f32.mrf.mxu0
        %v541 = vadd.f32 %v389, %v540
        %v542 = vpop.f32.mrf.mxu0
        %543 = vmatprep.mubr.bf16.mxu0 0
        %544 = vmatmul.mubr.bf16.gmra.mxu0 %v345
        %v545 = vpop.f32.mrf.mxu0
        %v546 = vadd.f32 %v389, %v545
        %v547 = vpop.f32.mrf.mxu0
        %v548 = vpop.f32.mrf.mxu0
        %v549 = vadd.f32 %v389, %v548
        %v550 = vpop.f32.mrf.mxu0
        %551 = vmatprep.mubr.bf16.mxu0 0
        %552 = vmatmul.mubr.bf16.gmra.mxu0 %v346
        %v553 = vpop.f32.mrf.mxu0
        %v554 = vadd.f32 %v389, %v553
        %v555 = vpop.f32.mrf.mxu0
        %v556 = vpop.f32.mrf.mxu0
        %v557 = vadd.f32 %v389, %v556
        %v558 = vpop.f32.mrf.mxu0
        %559 = vmatprep.mubr.bf16.mxu0 0
        %560 = vmatmul.mubr.bf16.gmra.mxu0 %v347
        %v561 = vpop.f32.mrf.mxu0
        %v562 = vadd.f32 %v389, %v561
        %v563 = vpop.f32.mrf.mxu0
        %v564 = vpop.f32.mrf.mxu0
        %v565 = vadd.f32 %v389, %v564
        %v566 = vpop.f32.mrf.mxu0
        %567 = vmatprep.mubr.bf16.mxu0 0
        %568 = vmatmul.mubr.bf16.gmra.mxu0 %v348
        %v569 = vpop.f32.mrf.mxu0
        %v570 = vadd.f32 %v389, %v569
        %v571 = vpop.f32.mrf.mxu0
        %v572 = vpop.f32.mrf.mxu0
        %v573 = vadd.f32 %v389, %v572
        %v574 = vpop.f32.mrf.mxu0
        %575 = vmatprep.mubr.bf16.mxu0 0
        %576 = vmatmul.mubr.bf16.gmra.mxu0 %v349
        %v577 = vpop.f32.mrf.mxu0
        %v578 = vadd.f32 %v389, %v577
        %v579 = vpop.f32.mrf.mxu0
        %v580 = vpop.f32.mrf.mxu0
        %v581 = vadd.f32 %v389, %v580
        %v582 = vpop.f32.mrf.mxu0
        %583 = vmatprep.mubr.bf16.mxu0 0
        %584 = vmatmul.mubr.bf16.gmra.mxu0 %v350
        %v585 = vpop.f32.mrf.mxu0
        %v586 = vadd.f32 %v389, %v585
        %v587 = vpop.f32.mrf.mxu0
        %v588 = vpop.f32.mrf.mxu0
        %v589 = vadd.f32 %v389, %v588
        %v590 = vpop.f32.mrf.mxu0
        %591 = vmatprep.mubr.bf16.mxu0 0
        %592 = vmatmul.mubr.bf16.gmra.mxu0 %v351
        %v593 = vpop.f32.mrf.mxu0
        %v594 = vadd.f32 %v389, %v593
        %v595 = vpop.f32.mrf.mxu0
        %v596 = vpop.f32.mrf.mxu0
        %v597 = vadd.f32 %v389, %v596
        %v598 = vpop.f32.mrf.mxu0
        %599 = vmatprep.mubr.bf16.mxu0 0
        %600 = vmatmul.mubr.bf16.gmra.mxu0 %v352
        %v601 = vpop.f32.mrf.mxu0
        %v602 = vadd.f32 %v389, %v601
        %v603 = vpop.f32.mrf.mxu0
        %v604 = vpop.f32.mrf.mxu0
        %v605 = vadd.f32 %v389, %v604
        %v606 = vpop.f32.mrf.mxu0
        %607 = vmatprep.mubr.bf16.mxu0 0
        %608 = vmatmul.mubr.bf16.gmra.mxu0 %v353
        %v609 = vpop.f32.mrf.mxu0
        %v610 = vadd.f32 %v389, %v609
        %v611 = vpop.f32.mrf.mxu0
        %v612 = vpop.f32.mrf.mxu0
        %v613 = vadd.f32 %v389, %v612
        %v614 = vpop.f32.mrf.mxu0
        %615 = vmatprep.mubr.bf16.mxu0 0
        %616 = vmatmul.mubr.bf16.gmra.mxu0 %v354
        %v617 = vpop.f32.mrf.mxu0
        %v618 = vadd.f32 %v389, %v617
        %v619 = vpop.f32.mrf.mxu0
        %v620 = vpop.f32.mrf.mxu0
        %v621 = vadd.f32 %v389, %v620
        %v622 = vpop.f32.mrf.mxu0
        %623 = vmatprep.mubr.bf16.mxu0 0
        %624 = vmatmul.mubr.bf16.gmra.mxu0 %v355
        %v625 = vpop.f32.mrf.mxu0
        %v626 = vadd.f32 %v389, %v625
        %v627 = vpop.f32.mrf.mxu0
        %v628 = vpop.f32.mrf.mxu0
        %v629 = vadd.f32 %v389, %v628
        %v630 = vpop.f32.mrf.mxu0
        %631 = vmatprep.mubr.bf16.mxu0 0
        %632 = vmatmul.mubr.bf16.gmra.mxu0 %v356
        %v633 = vpop.f32.mrf.mxu0
        %v634 = vadd.f32 %v389, %v633
        %v635 = vpop.f32.mrf.mxu0
        %v636 = vpop.f32.mrf.mxu0
        %v637 = vadd.f32 %v389, %v636
        %v638 = vpop.f32.mrf.mxu0
        %639 = vmatprep.mubr.bf16.mxu0 0
        %640 = vmatmul.mubr.bf16.gmra.mxu0 %v357
        %v641 = vpop.f32.mrf.mxu0
        %v642 = vadd.f32 %v389, %v641
        %v643 = vpop.f32.mrf.mxu0
        %v644 = vpop.f32.mrf.mxu0
        %v645 = vadd.f32 %v389, %v644
        %v646 = vpop.f32.mrf.mxu0
        %647 = vmatprep.mubr.bf16.mxu0 0
        %648 = vmatmul.mubr.bf16.gmra.mxu0 %v358
        %v649 = vpop.f32.mrf.mxu0
        %v650 = vadd.f32 %v389, %v649
        %v651 = vpop.f32.mrf.mxu0
        %v652 = vpop.f32.mrf.mxu0
        %v653 = vadd.f32 %v389, %v652
        %v654 = vpop.f32.mrf.mxu0
        %655 = vmatprep.mubr.bf16.mxu0 0
        %656 = vmatmul.mubr.bf16.gmra.mxu0 %v359
        %v657 = vpop.f32.mrf.mxu0
        %v658 = vadd.f32 %v389, %v657
        %v659 = vpop.f32.mrf.mxu0
        %v660 = vpop.f32.mrf.mxu0
        %v661 = vadd.f32 %v389, %v660
        %v662 = vpop.f32.mrf.mxu0
        %663 = vmatprep.mubr.bf16.mxu0 0
        %664 = vmatmul.mubr.bf16.gmra.mxu0 %v360
        %v665 = vpop.f32.mrf.mxu0
        %v666 = vadd.f32 %v389, %v665
        %v667 = vpop.f32.mrf.mxu0
        %v668 = vpop.f32.mrf.mxu0
        %v669 = vadd.f32 %v389, %v668
        %v670 = vpop.f32.mrf.mxu0
        %671 = vmatprep.mubr.bf16.mxu0 0
        %672 = vmatmul.mubr.bf16.gmra.mxu0 %v361
        %v673 = vpop.f32.mrf.mxu0
        %v674 = vadd.f32 %v389, %v673
        %v675 = vpop.f32.mrf.mxu0
        %v676 = vpop.f32.mrf.mxu0
        %v677 = vadd.f32 %v389, %v676
        %v678 = vpop.f32.mrf.mxu0
        %679 = vmatprep.mubr.bf16.mxu0 0
        %680 = vmatmul.mubr.bf16.gmra.mxu0 %v362
        %v681 = vpop.f32.mrf.mxu0
        %v682 = vadd.f32 %v389, %v681
        %v683 = vpop.f32.mrf.mxu0
        %v684 = vpop.f32.mrf.mxu0
        %v685 = vadd.f32 %v389, %v684
        %v686 = vpop.f32.mrf.mxu0
        %687 = vmatprep.mubr.bf16.mxu0 0
        %688 = vmatmul.mubr.bf16.gmra.mxu0 %v363
        %v689 = vpop.f32.mrf.mxu0
        %v690 = vadd.f32 %v389, %v689
        %v691 = vpop.f32.mrf.mxu0
        %v692 = vpop.f32.mrf.mxu0
        %v693 = vadd.f32 %v389, %v692
        %v694 = vpop.f32.mrf.mxu0
        %695 = vmatprep.mubr.bf16.mxu0 0
        %696 = vmatmul.mubr.bf16.gmra.mxu0 %v364
        %v697 = vpop.f32.mrf.mxu0
        %v698 = vadd.f32 %v389, %v697
        %v699 = vpop.f32.mrf.mxu0
        %v700 = vpop.f32.mrf.mxu0
        %v701 = vadd.f32 %v389, %v700
        %v702 = vpop.f32.mrf.mxu0
        %703 = vmatprep.mubr.bf16.mxu0 0
        %704 = vmatmul.mubr.bf16.gmra.mxu0 %v365
        %v705 = vpop.f32.mrf.mxu0
        %v706 = vadd.f32 %v389, %v705
        %v707 = vpop.f32.mrf.mxu0
        %v708 = vpop.f32.mrf.mxu0
        %v709 = vadd.f32 %v389, %v708
        %v710 = vpop.f32.mrf.mxu0
        %711 = vmatprep.mubr.bf16.mxu0 0
        %712 = vmatmul.mubr.bf16.gmra.mxu0 %v366
        %v713 = vpop.f32.mrf.mxu0
        %v714 = vadd.f32 %v389, %v713
        %v715 = vpop.f32.mrf.mxu0
        %v716 = vpop.f32.mrf.mxu0
        %v717 = vadd.f32 %v389, %v716
        %v718 = vpop.f32.mrf.mxu0
        %719 = vmatprep.mubr.bf16.mxu0 0
        %720 = vmatmul.mubr.bf16.gmra.mxu0 %v367
        %v721 = vpop.f32.mrf.mxu0
        %v722 = vadd.f32 %v389, %v721
        %v723 = vpop.f32.mrf.mxu0
        %v724 = vpop.f32.mrf.mxu0
        %v725 = vadd.f32 %v389, %v724
        %v726 = vpop.f32.mrf.mxu0
        %727 = vdwg.mxu0
        %v728 = vld [vmem:[%s238] sm:$0xff]
        %v729 = vld [vmem:[%s238 + $0x8] sm:$0xff]
        %v730 = vld [vmem:[%s238 + $0x10] sm:$0xff]
        %v731 = vld [vmem:[%s238 + $0x18] sm:$0xff]
        %v732 = vld [vmem:[%s238 + $0x20] sm:$0xff]
        %v733 = vld [vmem:[%s238 + $0x28] sm:$0xff]
        %v734 = vld [vmem:[%s238 + $0x30] sm:$0xff]
        %v735 = vld [vmem:[%s238 + $0x38] sm:$0xff]
        %v736 = vld [vmem:[%s238 + $0x40] sm:$0xff]
        %v737 = vld [vmem:[%s238 + $0x48] sm:$0xff]
        %v738 = vld [vmem:[%s238 + $0x50] sm:$0xff]
        %v739 = vld [vmem:[%s238 + $0x58] sm:$0xff]
        %v740 = vld [vmem:[%s238 + $0x60] sm:$0xff]
        %v741 = vld [vmem:[%s238 + $0x68] sm:$0xff]
        %v742 = vld [vmem:[%s238 + $0x70] sm:$0xff]
        %v743 = vld [vmem:[%s238 + $0x78] sm:$0xff]
        %v744 = vld [vmem:[%s238 + $0x80] sm:$0xff]
        %v745 = vld [vmem:[%s238 + $0x88] sm:$0xff]
        %v746 = vld [vmem:[%s238 + $0x90] sm:$0xff]
        %v747 = vld [vmem:[%s238 + $0x98] sm:$0xff]
        %v748 = vld [vmem:[%s238 + $0xa0] sm:$0xff]
        %v749 = vld [vmem:[%s238 + $0xa8] sm:$0xff]
        %v750 = vld [vmem:[%s238 + $0xb0] sm:$0xff]
        %v751 = vld [vmem:[%s238 + $0xb8] sm:$0xff]
        %v752 = vld [vmem:[%s238 + $0xc0] sm:$0xff]
        %v753 = vld [vmem:[%s238 + $0xc8] sm:$0xff]
        %v754 = vld [vmem:[%s238 + $0xd0] sm:$0xff]
        %v755 = vld [vmem:[%s238 + $0xd8] sm:$0xff]
        %v756 = vld [vmem:[%s238 + $0xe0] sm:$0xff]
        %v757 = vld [vmem:[%s238 + $0xe8] sm:$0xff]
        %v758 = vld [vmem:[%s238 + $0xf0] sm:$0xff]
        %v759 = vld [vmem:[%s238 + $0xf8] sm:$0xff]
        %v760 = vld [vmem:[%s238 + $0x100] sm:$0xff]
        %v761 = vld [vmem:[%s238 + $0x108] sm:$0xff]
        %v762 = vld [vmem:[%s238 + $0x110] sm:$0xff]
        %v763 = vld [vmem:[%s238 + $0x118] sm:$0xff]
        %v764 = vld [vmem:[%s238 + $0x120] sm:$0xff]
        %v765 = vld [vmem:[%s238 + $0x128] sm:$0xff]
        %v766 = vld [vmem:[%s238 + $0x130] sm:$0xff]
        %v767 = vld [vmem:[%s238 + $0x138] sm:$0xff]
        %v768 = vld [vmem:[%s238 + $0x140] sm:$0xff]
        %v769 = vld [vmem:[%s238 + $0x148] sm:$0xff]
        %v770 = vld [vmem:[%s238 + $0x150] sm:$0xff]
        %v771 = vld [vmem:[%s238 + $0x158] sm:$0xff]
        %v772 = vld [vmem:[%s238 + $0x160] sm:$0xff]
        %v773 = vld [vmem:[%s238 + $0x168] sm:$0xff]
        %v774 = vld [vmem:[%s238 + $0x170] sm:$0xff]
        %v775 = vld [vmem:[%s238 + $0x178] sm:$0xff]
        %v776 = vld [vmem:[%s238 + $0x180] sm:$0xff]
        %v777 = vld [vmem:[%s238 + $0x188] sm:$0xff]
        %v778 = vld [vmem:[%s238 + $0x190] sm:$0xff]
        %v779 = vld [vmem:[%s238 + $0x198] sm:$0xff]
        %v780 = vld [vmem:[%s238 + $0x1a0] sm:$0xff]
        %v781 = vld [vmem:[%s238 + $0x1a8] sm:$0xff]
        %v782 = vld [vmem:[%s238 + $0x1b0] sm:$0xff]
        %v783 = vld [vmem:[%s238 + $0x1b8] sm:$0xff]
        %v784 = vld [vmem:[%s238 + $0x1c0] sm:$0xff]
        %v785 = vld [vmem:[%s238 + $0x1c8] sm:$0xff]
        %v786 = vld [vmem:[%s238 + $0x1d0] sm:$0xff]
        %v787 = vld [vmem:[%s238 + $0x1d8] sm:$0xff]
        %v788 = vld [vmem:[%s238 + $0x1e0] sm:$0xff]
        %v789 = vld [vmem:[%s238 + $0x1e8] sm:$0xff]
        %v790 = vld [vmem:[%s238 + $0x1f0] sm:$0xff]
        %v791 = vld [vmem:[%s238 + $0x1f8] sm:$0xff]
        %v792 = vadd.f32 %v474, %v728
        %v793 = vadd.f32 %v477, %v729
        %v794 = vadd.f32 %v482, %v730
        %v795 = vadd.f32 %v485, %v731
        %v796 = vadd.f32 %v490, %v732
        %v797 = vadd.f32 %v493, %v733
        %v798 = vadd.f32 %v498, %v734
        %v799 = vadd.f32 %v501, %v735
        %v800 = vadd.f32 %v506, %v736
        %v801 = vadd.f32 %v509, %v737
        %v802 = vadd.f32 %v514, %v738
        %v803 = vadd.f32 %v517, %v739
        %v804 = vadd.f32 %v522, %v740
        %v805 = vadd.f32 %v525, %v741
        %v806 = vadd.f32 %v530, %v742
        %v807 = vadd.f32 %v533, %v743
        %v808 = vadd.f32 %v538, %v744
        %v809 = vadd.f32 %v541, %v745
        %v810 = vadd.f32 %v546, %v746
        %v811 = vadd.f32 %v549, %v747
        %v812 = vadd.f32 %v554, %v748
        %v813 = vadd.f32 %v557, %v749
        %v814 = vadd.f32 %v562, %v750
        %v815 = vadd.f32 %v565, %v751
        %v816 = vadd.f32 %v570, %v752
        %v817 = vadd.f32 %v573, %v753
        %v818 = vadd.f32 %v578, %v754
        %v819 = vadd.f32 %v581, %v755
        %v820 = vadd.f32 %v586, %v756
        %v821 = vadd.f32 %v589, %v757
        %v822 = vadd.f32 %v594, %v758
        %v823 = vadd.f32 %v597, %v759
        %v824 = vadd.f32 %v602, %v760
        %v825 = vadd.f32 %v605, %v761
        %v826 = vadd.f32 %v610, %v762
        %v827 = vadd.f32 %v613, %v763
        %v828 = vadd.f32 %v618, %v764
        %v829 = vadd.f32 %v621, %v765
        %v830 = vadd.f32 %v626, %v766
        %v831 = vadd.f32 %v629, %v767
        %v832 = vadd.f32 %v634, %v768
        %v833 = vadd.f32 %v637, %v769
        %v834 = vadd.f32 %v642, %v770
        %v835 = vadd.f32 %v645, %v771
        %v836 = vadd.f32 %v650, %v772
        %v837 = vadd.f32 %v653, %v773
        %v838 = vadd.f32 %v658, %v774
        %v839 = vadd.f32 %v661, %v775
        %v840 = vadd.f32 %v666, %v776
        %v841 = vadd.f32 %v669, %v777
        %v842 = vadd.f32 %v674, %v778
        %v843 = vadd.f32 %v677, %v779
        %v844 = vadd.f32 %v682, %v780
        %v845 = vadd.f32 %v685, %v781
        %v846 = vadd.f32 %v690, %v782
        %v847 = vadd.f32 %v693, %v783
        %v848 = vadd.f32 %v698, %v784
        %v849 = vadd.f32 %v701, %v785
        %v850 = vadd.f32 %v706, %v786
        %v851 = vadd.f32 %v709, %v787
        %v852 = vadd.f32 %v714, %v788
        %v853 = vadd.f32 %v717, %v789
        %v854 = vadd.f32 %v722, %v790
        %v855 = vadd.f32 %v725, %v791
        %856 = vst [vmem:[%s267] sm:$0xff] %v792
        %857 = vst [vmem:[%s267 + $0x8] sm:$0xff] %v793
        %858 = vst [vmem:[%s267 + $0x10] sm:$0xff] %v794
        %859 = vst [vmem:[%s267 + $0x18] sm:$0xff] %v795
        %860 = vst [vmem:[%s267 + $0x20] sm:$0xff] %v796
        %861 = vst [vmem:[%s267 + $0x28] sm:$0xff] %v797
        %862 = vst [vmem:[%s267 + $0x30] sm:$0xff] %v798
        %863 = vst [vmem:[%s267 + $0x38] sm:$0xff] %v799
        %864 = vst [vmem:[%s267 + $0x40] sm:$0xff] %v800
        %865 = vst [vmem:[%s267 + $0x48] sm:$0xff] %v801
        %866 = vst [vmem:[%s267 + $0x50] sm:$0xff] %v802
        %867 = vst [vmem:[%s267 + $0x58] sm:$0xff] %v803
        %868 = vst [vmem:[%s267 + $0x60] sm:$0xff] %v804
        %869 = vst [vmem:[%s267 + $0x68] sm:$0xff] %v805
        %870 = vst [vmem:[%s267 + $0x70] sm:$0xff] %v806
        %871 = vst [vmem:[%s267 + $0x78] sm:$0xff] %v807
        %872 = vst [vmem:[%s267 + $0x80] sm:$0xff] %v808
        %873 = vst [vmem:[%s267 + $0x88] sm:$0xff] %v809
        %874 = vst [vmem:[%s267 + $0x90] sm:$0xff] %v810
        %875 = vst [vmem:[%s267 + $0x98] sm:$0xff] %v811
        %876 = vst [vmem:[%s267 + $0xa0] sm:$0xff] %v812
        %877 = vst [vmem:[%s267 + $0xa8] sm:$0xff] %v813
        %878 = vst [vmem:[%s267 + $0xb0] sm:$0xff] %v814
        %879 = vst [vmem:[%s267 + $0xb8] sm:$0xff] %v815
        %880 = vst [vmem:[%s267 + $0xc0] sm:$0xff] %v816
        %881 = vst [vmem:[%s267 + $0xc8] sm:$0xff] %v817
        %882 = vst [vmem:[%s267 + $0xd0] sm:$0xff] %v818
        %883 = vst [vmem:[%s267 + $0xd8] sm:$0xff] %v819
        %884 = vst [vmem:[%s267 + $0xe0] sm:$0xff] %v820
        %885 = vst [vmem:[%s267 + $0xe8] sm:$0xff] %v821
        %886 = vst [vmem:[%s267 + $0xf0] sm:$0xff] %v822
        %887 = vst [vmem:[%s267 + $0xf8] sm:$0xff] %v823
        %888 = vst [vmem:[%s267 + $0x100] sm:$0xff] %v824
        %889 = vst [vmem:[%s267 + $0x108] sm:$0xff] %v825
        %890 = vst [vmem:[%s267 + $0x110] sm:$0xff] %v826
        %891 = vst [vmem:[%s267 + $0x118] sm:$0xff] %v827
        %892 = vst [vmem:[%s267 + $0x120] sm:$0xff] %v828
        %893 = vst [vmem:[%s267 + $0x128] sm:$0xff] %v829
        %894 = vst [vmem:[%s267 + $0x130] sm:$0xff] %v830
        %895 = vst [vmem:[%s267 + $0x138] sm:$0xff] %v831
        %896 = vst [vmem:[%s267 + $0x140] sm:$0xff] %v832
        %897 = vst [vmem:[%s267 + $0x148] sm:$0xff] %v833
        %898 = vst [vmem:[%s267 + $0x150] sm:$0xff] %v834
        %899 = vst [vmem:[%s267 + $0x158] sm:$0xff] %v835
        %900 = vst [vmem:[%s267 + $0x160] sm:$0xff] %v836
        %901 = vst [vmem:[%s267 + $0x168] sm:$0xff] %v837
        %902 = vst [vmem:[%s267 + $0x170] sm:$0xff] %v838
        %903 = vst [vmem:[%s267 + $0x178] sm:$0xff] %v839
        %904 = vst [vmem:[%s267 + $0x180] sm:$0xff] %v840
        %905 = vst [vmem:[%s267 + $0x188] sm:$0xff] %v841
        %906 = vst [vmem:[%s267 + $0x190] sm:$0xff] %v842
        %907 = vst [vmem:[%s267 + $0x198] sm:$0xff] %v843
        %908 = vst [vmem:[%s267 + $0x1a0] sm:$0xff] %v844
        %909 = vst [vmem:[%s267 + $0x1a8] sm:$0xff] %v845
        %910 = vst [vmem:[%s267 + $0x1b0] sm:$0xff] %v846
        %911 = vst [vmem:[%s267 + $0x1b8] sm:$0xff] %v847
        %912 = vst [vmem:[%s267 + $0x1c0] sm:$0xff] %v848
        %913 = vst [vmem:[%s267 + $0x1c8] sm:$0xff] %v849
        %914 = vst [vmem:[%s267 + $0x1d0] sm:$0xff] %v850
        %915 = vst [vmem:[%s267 + $0x1d8] sm:$0xff] %v851
        %916 = vst [vmem:[%s267 + $0x1e0] sm:$0xff] %v852
        %917 = vst [vmem:[%s267 + $0x1e8] sm:$0xff] %v853
        %918 = vst [vmem:[%s267 + $0x1f0] sm:$0xff] %v854
        %919 = vst [vmem:[%s267 + $0x1f8] sm:$0xff] %v855
        %s920 = sand.u32 %s124, 1
        %s921 = scalar_lea.sflag [#allocation4], %s920
        %s922 = sand.u32 %s124, 1
        %s923 = smul.addr %s922, 512
        %s924 = scalar_lea.vmem [#allocation8], %s923
        // Predicated region
        $region49: #{tpu_custom_call.1} parent=35 // pred_check
          %p925 = pneg %p134
        $region50: #{tpu_custom_call.1} parent=35 // pred_check_branch
          %927 = sbr.rel (%p925) target = $region52
        $region51: #{tpu_custom_call.1} parent=35 // pred_region
          %s928 = smul.u32 64, %s22
          %s930 = ssub.s32 8192, 8192
          %931 = vsyncadd %s921, %s930
          %s932 = smul.addr %s928, 128
          %s933 = scalar_lea.hbm %s4, %s932
          %s934 = sshll.u32 %s924, 4
          %s935 = int_to_ptr.vmem [resolvable:$true] %s934
          %940 = dma.vmem_to_hbm [thread:$0]  %s935, 8192, %s933, %s921, 128, 128, 8
        $region52: #{tpu_custom_call.1} parent=35 // pred_fallthru
          _
      $region36: #{tpu_custom_call.1} parent=5 // pred_fallthru
        _
      %p941 = scmp.le.s32.totalorder 2, %s17
      // Predicated region
      $region53: #{tpu_custom_call.1} parent=5 // pred_check
        %p942 = pneg %p941
      $region54: #{tpu_custom_call.1} parent=5 // pred_check_branch
        %944 = sbr.rel (%p942) target = $region56
      $region55: #{tpu_custom_call.1} parent=5 // pred_region
        %s945 = ssub.s32 %s17, 2
        // Predicated region
        $region57: #{tpu_custom_call.1} parent=55 // pred_check
          %p946 = pneg %p140
        $region58: #{tpu_custom_call.1} parent=55 // pred_check_branch
          %948 = sbr.rel (%p946) target = $region60
        $region59: #{tpu_custom_call.1} parent=55 // pred_region
          %s949 = sand.u32 %s125, 1
          %s950 = scalar_lea.sflag [#allocation4], %s949
          %s951 = sand.u32 %s125, 1
          %s952 = smul.addr %s951, 512
          %s953 = scalar_lea.vmem [#allocation8], %s952
          %954 = dma.done %s950, 8192
        $region60: #{tpu_custom_call.1} parent=55 // pred_fallthru
          _
      $region56: #{tpu_custom_call.1} parent=5 // pred_fallthru
        _
    $region6: #{tpu_custom_call.1} parent=1 // loop_footer
      %s21 = sadd.s32 1, %s17
    $region7: #{tpu_custom_call.1} parent=1 // loop_footer_branch
      %16 = sbr.rel target = $region3
    $region8: #{tpu_custom_call.1} parent=1 // loop_exit
      _
    %955 = vsyncpa [#allocation3], 1
    %s956 = scalar_lea.sflag [#allocation3], 1
    %957 = vsyncpa %s956, 1
    %958 = vsyncpa [#allocation6], 1
    %959 = vsyncpa [#allocation4], 1
    %s960 = scalar_lea.sflag [#allocation4], 1
    %961 = vsyncpa %s960, 1

</llo_original>
